<compile_context>
chip_gen: v6e
topology: v6e:2x2x1
jax: 0.10.0
libtpu: 0.0.40
codegen_flags: <defaults>
</compile_context>

<pallas_src>
import jax
import jax.numpy as jnp
from jax.experimental import pallas as pl
from jax.experimental.pallas import tpu as pltpu

_LANE = 128
_BLOCK_ROWS = 1024  # 1024 x 128 x 4B = 512 KiB per f32 buffer


def _scalar_mul_kernel(s_ref, x_ref, o_ref):
    # s_ref: (1,) scalar parameter in SMEM (f32)
    # x_ref / o_ref: (block_rows, 128) tile in VMEM
    s = s_ref[0].astype(x_ref.dtype)
    o_ref[...] = (s * x_ref[...]).astype(o_ref.dtype)


def _run_slab(scalar_param: jax.Array, x2d: jax.Array) -> jax.Array:
    rows, lane = x2d.shape
    # Block rows: full extent if small, otherwise a fixed 8-aligned tile.
    block_rows = rows if rows <= _BLOCK_ROWS else _BLOCK_ROWS
    grid = (pl.cdiv(rows, block_rows),)

    return pl.pallas_call(
        _scalar_mul_kernel,
        out_shape=jax.ShapeDtypeStruct((rows, lane), x2d.dtype),
        grid_spec=pltpu.PrefetchScalarGridSpec(
            num_scalar_prefetch=0,
            grid=grid,
            in_specs=[
                pl.BlockSpec(memory_space=pltpu.SMEM),                  # scalar param
                pl.BlockSpec((block_rows, lane), lambda i: (i, 0)),     # input tile
            ],
            out_specs=pl.BlockSpec((block_rows, lane), lambda i: (i, 0)),
        ),
        compiler_params=pltpu.CompilerParams(
            dimension_semantics=("parallel",),
        ),
    )(scalar_param, x2d)


def scalar_forward(scalar_param: jax.Array, x: jax.Array) -> jax.Array:
    """Equivalent of Scalar.forward: scalar_param * x (broadcast scalar)."""
    orig_shape = x.shape
    orig_dtype = x.dtype
    scalar_param = scalar_param.astype(jnp.float32)

    n = x.size
    if n % _LANE == 0:
        # Fast path: no padding, no tail slice — contiguous reshapes are free.
        rows = n // _LANE
        x2d = jnp.ravel(x).reshape(rows, _LANE)
        out2d = _run_slab(scalar_param, x2d)
        return out2d.reshape(orig_shape)

    # Ragged path: pad only up to the next multiple of 128 lanes.
    n_pad = ((n + _LANE - 1) // _LANE) * _LANE
    x_flat = jnp.pad(jnp.ravel(x), (0, n_pad - n))
    rows = n_pad // _LANE
    out2d = _run_slab(scalar_param, x_flat.reshape(rows, _LANE))
    return out2d.reshape(-1)[:n].reshape(orig_shape).astype(orig_dtype)


if __name__ == "__main__":
    key = jax.random.PRNGKey(0)

    # Deterministic parameter init matching nn.Parameter(torch.tensor([1.0])).
    scalar_param = jnp.array([1.0], dtype=jnp.float32)

    # Example input (small NCHW tensor, consistent with a conv-style module input).
    x = jax.random.normal(key, (2, 4, 16, 16), dtype=jnp.float32)

    out = scalar_forward(scalar_param, x)
    out = jax.block_until_ready(out)

    # Reference check (pure JAX).
    ref = scalar_param[0] * x
    assert out.shape == x.shape
    assert out.dtype == x.dtype
    assert jnp.allclose(out, ref, atol=1e-6), "mismatch vs reference (aligned path)"

    # Also exercise a non-1.0 scalar and the ragged (non-multiple-of-128) path.
    scalar2 = jnp.array([2.5], dtype=jnp.float32)
    key2 = jax.random.PRNGKey(0)
    x2 = jax.random.normal(key2, (3, 5, 7), dtype=jnp.float32)  # 105 elements
    out2 = jax.block_until_ready(scalar_forward(scalar2, x2))
    ref2 = scalar2[0] * x2
    assert out2.shape == x2.shape and out2.dtype == x2.dtype
    assert jnp.allclose(out2, ref2, atol=1e-6), "mismatch vs reference (ragged path)"

    print("KERNEL_OK")
</pallas_src>

<mosaic_0001>
module attributes {stable_mosaic.version = 11 : i64} {
  func.func @_scalar_mul_kernel(%arg0: i32, %arg1: memref<1xf32, #tpu.memory_space<smem>>, %arg2: memref<16x128xf32, #tpu.memory_space<vmem>>, %arg3: memref<16x128xf32, #tpu.memory_space<vmem>>) attributes {dimension_semantics = [#tpu.dimension_semantics<parallel>], iteration_bounds = array<i64: 1>, scalar_prefetch = 0 : i64, scratch_operands = 0 : i64, tpu.core_type = #tpu.core_type<tc>, window_params = [{transform_indices = @transform_0, window_bounds = array<i64: 1>}, {transform_indices = @transform_1, window_bounds = array<i64: 16, 128>}, {transform_indices = @transform_2, window_bounds = array<i64: 16, 128>}]} {
    %c0 = arith.constant 0 : index
    %0 = memref.load %arg1[%c0] : memref<1xf32, #tpu.memory_space<smem>>
    %c0_0 = arith.constant 0 : index
    %c0_1 = arith.constant 0 : index
    %1 = vector.load %arg2[%c0_0, %c0_1] : memref<16x128xf32, #tpu.memory_space<vmem>>, vector<16x128xf32>
    %2 = vector.broadcast %0 : f32 to vector<16x128xf32>
    %3 = arith.mulf %2, %1 : vector<16x128xf32>
    %c0_2 = arith.constant 0 : index
    %c0_3 = arith.constant 0 : index
    %4 = vector.load %arg3[%c0_2, %c0_3] : memref<16x128xf32, #tpu.memory_space<vmem>>, vector<16x128xf32>
    tpu.vector_store %arg3[%c0_2, %c0_3], %3 {strides = array<i32>} : memref<16x128xf32, #tpu.memory_space<vmem>>, vector<16x128xf32>,
    return
  }
  func.func @transform_0(%arg0: i32) -> i32 {
    %c0_i32 = arith.constant 0 : i32
    %c0_i32_0 = arith.constant 0 : i32
    return %c0_i32 : i32
  }
  func.func @transform_1(%arg0: i32) -> (i32, i32) {
    %c0_i32 = arith.constant 0 : i32
    %c0_i32_0 = arith.constant 0 : i32
    return %arg0, %c0_i32 : i32, i32
  }
  func.func @transform_2(%arg0: i32) -> (i32, i32) {
    %c0_i32 = arith.constant 0 : i32
    %c0_i32_0 = arith.constant 0 : i32
    return %arg0, %c0_i32 : i32, i32
  }
}

</mosaic_0001>

<llo_original>
// kernel: tpu_custom_call.1
$region0: #{tpu_custom_call.1}
  #allocation0 [shape = 'u32[]', space=smem, size = 0x4, offset = 0x4, fixed_abs, tag = 'smem constant byte address 0x4 - core index']
  #allocation1 [shape = 'u32[144,128]{1,0:T(1,128)}', space=vmem, size = 0x12000, scoped, tag = 'internal scratch']
  #allocation2 [shape = 'f32[1]{0:T(128)S(6)}', space=smem, size = 0x200, scoped, tag = 'scoped memory for tpu_custom_call.1']
  %s0 = inlined_call_operand.<no memory space> [shape: f32[1], index: 0, kind: input, shape index: {}]
  %s1 = inlined_call_operand.hbm [shape: f32[16,128], index: 1, kind: input, shape index: {}]
  %s2 = inlined_call_operand.hbm [shape: f32[16,128], index: 2, kind: output, shape index: {}]
  %s3 = sld [smem:[#allocation0]]
  $region22: #{tpu_custom_call.1} parent=0
    _
  %s5 = ssub.s32 1, %s3
  %s6 = scalar_select 0, %s5, %s3
  %7 = sst [smem:[#allocation2]] %s0
  $region1: #{tpu_custom_call.1} parent=0
    #allocation3 [shape = 'u8[8192]{0}', space=vmem, size = 0x2000, scoped, tag = 'input window, operand 1, single buffered']
    #allocation4 [shape = 's32[1]{0}', space=sflag, size = 0x4, scoped, tag = 'scoped memory for tpu_custom_call.1']
    #allocation5 [shape = 's32[1]{0}', space=sflag, size = 0x4, scoped, tag = 'scoped memory for tpu_custom_call.1']
    #allocation6 [shape = 'u8[8192]{0}', space=vmem, size = 0x2000, scoped, tag = 'output window, operand 0, single buffered']
    %8 = vsyncpa [#allocation4], 0
    %9 = vsyncpa [#allocation5], 0
    // Predicated region
    $region2: #{tpu_custom_call.1} parent=1 // pred_check
      _
    $region3: #{tpu_custom_call.1} parent=1 // pred_check_branch
      %11 = sbr.rel (0) target = $region5
    $region4: #{tpu_custom_call.1} parent=1 // pred_region
      _
    $region5: #{tpu_custom_call.1} parent=1 // pred_fallthru
      _
    // Predicated region
    $region6: #{tpu_custom_call.1} parent=1 // pred_check
      _
    $region7: #{tpu_custom_call.1} parent=1 // pred_check_branch
      %13 = sbr.rel (0) target = $region9
    $region8: #{tpu_custom_call.1} parent=1 // pred_region
      %s15 = ssub.s32 256, 256
      %16 = vsyncadd [#allocation4], %s15
      %s17 = sshll.u32 [#allocation3], 4
      %s18 = int_to_ptr.vmem [resolvable:$true] %s17
      %23 = dma.hbm_to_vmem [thread:$0]  %s1, 256, %s18, [#allocation4], 128, 128, 8
    $region9: #{tpu_custom_call.1} parent=1 // pred_fallthru
      _
    // Predicated region
    $region10: #{tpu_custom_call.1} parent=1 // pred_check
      _
    $region11: #{tpu_custom_call.1} parent=1 // pred_check_branch
      %25 = sbr.rel (0) target = $region13
    $region12: #{tpu_custom_call.1} parent=1 // pred_region
      %26 = dma.done [#allocation4], 256
    $region13: #{tpu_custom_call.1} parent=1 // pred_fallthru
      _
    %s27 = sld [smem:[#allocation2]]
    %v28 = vld [vmem:[#allocation3] sm:$0xff]
    %v29 = vld [vmem:[#allocation3 + $0x8] sm:$0xff]
    %v30 = vstv %s27
    %v31 = vmul.f32 %v30, %v28
    %v32 = vmul.f32 %v30, %v29
    %33 = vst [vmem:[#allocation6] sm:$0xff] %v31
    %34 = vst [vmem:[#allocation6 + $0x8] sm:$0xff] %v32
    // Predicated region
    $region14: #{tpu_custom_call.1} parent=1 // pred_check
      _
    $region15: #{tpu_custom_call.1} parent=1 // pred_check_branch
      %36 = sbr.rel (0) target = $region17
    $region16: #{tpu_custom_call.1} parent=1 // pred_region
      %s38 = ssub.s32 256, 256
      %39 = vsyncadd [#allocation5], %s38
      %s40 = sshll.u32 [#allocation6], 4
      %s41 = int_to_ptr.vmem [resolvable:$true] %s40
      %46 = dma.vmem_to_hbm [thread:$0]  %s41, 256, %s2, [#allocation5], 128, 128, 8
    $region17: #{tpu_custom_call.1} parent=1 // pred_fallthru
      _
    // Predicated region
    $region18: #{tpu_custom_call.1} parent=1 // pred_check
      _
    $region19: #{tpu_custom_call.1} parent=1 // pred_check_branch
      %48 = sbr.rel (0) target = $region21
    $region20: #{tpu_custom_call.1} parent=1 // pred_region
      %49 = dma.done [#allocation5], 256
    $region21: #{tpu_custom_call.1} parent=1 // pred_fallthru
      _
    %50 = vsyncpa [#allocation4], 1
    %51 = vsyncpa [#allocation5], 1

</llo_original>
